<compile_context>
chip_gen: v7x
topology: tpu7x:2x2x1
jax: 0.10.0
libtpu: 0.0.40
codegen_flags: <defaults>
</compile_context>

<pallas_src>
import functools

import jax
import jax.numpy as jnp
from jax.experimental import pallas as pl
from jax.experimental.pallas import tpu as pltpu


def _round_up(n: int, m: int) -> int:
    return (n + m - 1) // m * m


# ---------------------------------------------------------------------------
# Fused Pallas kernel
# ---------------------------------------------------------------------------

def _temporal_block_kernel(x_ref, w1_ref, b1_ref, w2_ref, b2_ref, o_ref,
                           xs_ref, ys_ref, *, k_size, dilation, pad,
                           c_in, c_out):
    """One grid step = one batch element: out = relu(relu(conv2(relu(conv1(x)))) + x)."""
    length = x_ref.shape[-1]
    cpi = xs_ref.shape[0] // k_size          # sublane-padded C_in  per tap
    cpo = ys_ref.shape[0] // k_size          # sublane-padded C_out per tap

    x = x_ref[...].astype(jnp.float32)       # also the residual

    # ---- stacked, shifted input slab:
    #   xs[k*cpi + ci, t] = x[ci, t - (K-1-k)*dilation]   (0 where index < 0)
    # This fuses the causal left-pad and the chomp (the trailing `pad` outputs
    # are simply never produced) and turns conv1 into one MXU matmul.
    if pad > 0:                              # zero only the causal-pad prefix lanes
        xs_ref[:, :pad] = jnp.zeros((k_size * cpi, pad), jnp.float32)
    if cpi > c_in:                           # zero sublane-padding rows (static)
        for k in range(k_size):
            xs_ref[k * cpi + c_in:(k + 1) * cpi, :] = jnp.zeros(
                (cpi - c_in, length), jnp.float32)
    for k in range(k_size):
        s = (k_size - 1 - k) * dilation      # static per-tap right shift
        r0 = k * cpi
        if s == 0:
            xs_ref[r0:r0 + c_in, :] = x
        else:
            xs_ref[r0:r0 + c_in, s:] = x_ref[:, :length - s].astype(jnp.float32)

    # ---- conv1 -> chomp1 -> +b1 -> relu1  (dropout1 = identity, eval mode)
    # Single (C_out, K*C_in) x (K*C_in, L) matmul, f32 accumulation on the MXU.
    y1 = jnp.dot(w1_ref[...], xs_ref[...], preferred_element_type=jnp.float32)
    y1 = jnp.maximum(y1 + b1_ref[...], 0.0)

    # ---- stacked, shifted y1 slab (y1 never leaves VMEM)
    if pad > 0:
        ys_ref[:, :pad] = jnp.zeros((k_size * cpo, pad), jnp.float32)
    if cpo > c_out:
        for k in range(k_size):
            ys_ref[k * cpo + c_out:(k + 1) * cpo, :] = jnp.zeros(
                (cpo - c_out, length), jnp.float32)
    base = (k_size - 1) * cpo                # the zero-shift tap holds y1 itself
    ys_ref[base:base + c_out, :] = y1
    for k in range(k_size - 1):
        s = (k_size - 1 - k) * dilation
        r0 = k * cpo
        ys_ref[r0:r0 + c_out, s:] = ys_ref[base:base + c_out, :length - s]

    # ---- conv2 -> chomp2 -> +b2 -> relu2 -> + residual -> relu
    y2 = jnp.dot(w2_ref[...], ys_ref[...], preferred_element_type=jnp.float32)
    y2 = jnp.maximum(y2 + b2_ref[...], 0.0)
    o_ref[...] = jnp.maximum(y2 + x, 0.0).astype(o_ref.dtype)


# ---------------------------------------------------------------------------
# Host-side wrappers
# ---------------------------------------------------------------------------

def fold_weight_norm(v, g):
    """Effective Conv1d weight of torch weight_norm (dim=0): g * v / ||v||."""
    norm = jnp.sqrt(jnp.sum(v * v, axis=(1, 2), keepdims=True))
    return v * (g.reshape(-1, 1, 1) / norm)


def _stacked_weight(w, c_pad):
    """(C_out, C_in, K) conv weight -> (C_out, K*c_pad) matmul weight.

    Column k*c_pad + ci multiplies x[ci, t - (K-1-k)*dilation]; zero-padded to a
    sublane multiple so the stacked VMEM slab stays 8-row aligned per tap.
    """
    c_out, c_in, k_size = w.shape
    w_kic = jnp.transpose(w, (0, 2, 1))                      # (C_out, K, C_in)
    if c_pad > c_in:
        w_kic = jnp.pad(w_kic, ((0, 0), (0, 0), (0, c_pad - c_in)))
    return w_kic.reshape(c_out, k_size * c_pad).astype(jnp.float32)


def temporal_block(x, params, *, kernel_size, stride, dilation, padding):
    """Forward pass of TemporalBlock (inference / eval mode), fully fused."""
    assert x.ndim == 3, "expected (N, C, L) input"
    batch, c_in, length = x.shape
    # TODO(synk): strided conv (stride != 1) not implemented; TCN uses stride=1.
    assert stride == 1, "only stride=1 supported"
    assert padding == (kernel_size - 1) * dilation and padding >= 1, (
        "fused causal kernel assumes chomp_size == (kernel_size-1)*dilation >= 1")

    w1 = fold_weight_norm(params["v1"], params["g1"])
    w2 = fold_weight_norm(params["v2"], params["g2"])
    c_out = w1.shape[0]
    if c_in != c_out:
        # TODO(synk): spec's downsample Conv1d(kernel=1, padding=(K-1)*dilation)
        # yields a residual whose length mismatches `out` (PyTorch itself would
        # raise on the add); only the n_inputs == n_outputs path is implemented.
        raise NotImplementedError("n_inputs != n_outputs path not implemented")

    cpi = _round_up(c_in, 8)
    cpo = _round_up(c_out, 8)
    w1_mat = _stacked_weight(w1, cpi)                        # (C_out, K*cpi)
    w2_mat = _stacked_weight(w2, cpo)                        # (C_out, K*cpo)
    b1 = params["b1"].reshape(c_out, 1).astype(jnp.float32)
    b2 = params["b2"].reshape(c_out, 1).astype(jnp.float32)

    kernel = functools.partial(
        _temporal_block_kernel, k_size=kernel_size, dilation=dilation,
        pad=padding, c_in=c_in, c_out=c_out)

    # TODO(synk): dropout1/dropout2 are identity here (eval-mode forward);
    # training-mode dropout would use pltpu.prng_* inside the kernel.
    # TODO(synk): for very long L (esp. v7x's 64 MiB VMEM) the length axis
    # should be tiled with a `pad`-sized halo; full-L blocks are fine here
    # because the per-batch working set is tiny.
    return pl.pallas_call(
        kernel,
        out_shape=jax.ShapeDtypeStruct((batch, c_out, length), x.dtype),
        grid_spec=pltpu.PrefetchScalarGridSpec(
            num_scalar_prefetch=0,
            grid=(batch,),
            in_specs=[
                pl.BlockSpec((None, c_in, length), lambda b: (b, 0, 0)),     # x
                # Constant index_maps: weights/biases DMA once, stay resident.
                pl.BlockSpec((c_out, kernel_size * cpi), lambda b: (0, 0)),  # W1
                pl.BlockSpec((c_out, 1), lambda b: (0, 0)),                  # b1
                pl.BlockSpec((c_out, kernel_size * cpo), lambda b: (0, 0)),  # W2
                pl.BlockSpec((c_out, 1), lambda b: (0, 0)),                  # b2
            ],
            out_specs=pl.BlockSpec((None, c_out, length), lambda b: (b, 0, 0)),
            scratch_shapes=[
                pltpu.VMEM((kernel_size * cpi, length), jnp.float32),  # xs slab
                pltpu.VMEM((kernel_size * cpo, length), jnp.float32),  # ys slab
            ],
        ),
        compiler_params=pltpu.CompilerParams(
            dimension_semantics=("parallel",),     # batch shards across TCs (v7x)
            vmem_limit_bytes=32 * 1024 * 1024,     # raise v5e's 16 MiB default
        ),
    )(x, w1_mat, b1, w2_mat, b2)


# ---------------------------------------------------------------------------
# Pure-JAX reference + demo
# ---------------------------------------------------------------------------

def _ref_conv_relu(x, w, b, *, dilation, pad, residual=None):
    y = jax.lax.conv_general_dilated(
        x, w, window_strides=(1,), padding=[(pad, pad)],
        rhs_dilation=(dilation,),
        dimension_numbers=("NCH", "OIH", "NCH"),
        precision=jax.lax.Precision.HIGHEST)
    y = y + b[None, :, None]
    y = jnp.maximum(y[:, :, : y.shape[-1] - pad], 0.0)
    if residual is not None:
        y = jnp.maximum(y + residual, 0.0)
    return y


def temporal_block_ref(x, params, *, dilation, padding):
    w1 = fold_weight_norm(params["v1"], params["g1"])
    w2 = fold_weight_norm(params["v2"], params["g2"])
    y1 = _ref_conv_relu(x, w1, params["b1"], dilation=dilation, pad=padding)
    return _ref_conv_relu(y1, w2, params["b2"], dilation=dilation, pad=padding,
                          residual=x)


if __name__ == "__main__":
    key = jax.random.PRNGKey(0)
    k_v1, k_b1, k_v2, k_b2, k_x = jax.random.split(key, 5)

    batch, channels, length = 2, 16, 128
    kernel_size, stride, dilation = 3, 1, 2
    padding = (kernel_size - 1) * dilation      # causal TCN convention

    v1 = 0.1 * jax.random.normal(k_v1, (channels, channels, kernel_size), jnp.float32)
    v2 = 0.1 * jax.random.normal(k_v2, (channels, channels, kernel_size), jnp.float32)
    params = {
        "v1": v1,
        # weight_norm init: g = ||v|| per output channel (so w == v initially)
        "g1": jnp.sqrt(jnp.sum(v1 * v1, axis=(1, 2))),
        "b1": 0.1 * jax.random.normal(k_b1, (channels,), jnp.float32),
        "v2": v2,
        "g2": jnp.sqrt(jnp.sum(v2 * v2, axis=(1, 2))),
        "b2": 0.1 * jax.random.normal(k_b2, (channels,), jnp.float32),
    }
    x = jax.random.normal(k_x, (batch, channels, length), dtype=jnp.float32)

    out = temporal_block(x, params, kernel_size=kernel_size, stride=stride,
                         dilation=dilation, padding=padding)
    out = jax.block_until_ready(out)

    ref = temporal_block_ref(x, params, dilation=dilation, padding=padding)

    assert out.shape == (batch, channels, length)
    assert out.dtype == x.dtype
    # Tolerance covers the MXU's default-precision f32 matmul path (bf16-operand
    # passes with f32 accumulation) vs. the HIGHEST-precision XLA reference;
    # structural/indexing/halo bugs would show up as O(0.1-1) errors, far above
    # this threshold.
    assert jnp.allclose(out, ref, atol=1e-2, rtol=1e-2), (
        float(jnp.max(jnp.abs(out - ref))))

    print("KERNEL_OK")
</pallas_src>

<mosaic_0001>
module attributes {stable_mosaic.version = 11 : i64} {
  func.func @_temporal_block_kernel(%arg0: i32, %arg1: memref<1x16x128xf32, #tpu.memory_space<vmem>>, %arg2: memref<16x48xf32, #tpu.memory_space<vmem>>, %arg3: memref<16x1xf32, #tpu.memory_space<vmem>>, %arg4: memref<16x48xf32, #tpu.memory_space<vmem>>, %arg5: memref<16x1xf32, #tpu.memory_space<vmem>>, %arg6: memref<1x16x128xf32, #tpu.memory_space<vmem>>, %arg7: memref<48x128xf32, #tpu.memory_space<vmem>>, %arg8: memref<48x128xf32, #tpu.memory_space<vmem>>) attributes {dimension_semantics = [#tpu.dimension_semantics<parallel>], iteration_bounds = array<i64: 2>, scalar_prefetch = 0 : i64, scratch_operands = 2 : i64, tpu.core_type = #tpu.core_type<tc>, window_params = [{transform_indices = @transform_0, window_bounds = array<i64: 1, 16, 128>}, {pipeline_mode = #tpu.pipeline_mode<synchronous>, transform_indices = @transform_1, window_bounds = array<i64: 16, 48>}, {pipeline_mode = #tpu.pipeline_mode<synchronous>, transform_indices = @transform_2, window_bounds = array<i64: 16, 1>}, {pipeline_mode = #tpu.pipeline_mode<synchronous>, transform_indices = @transform_3, window_bounds = array<i64: 16, 48>}, {pipeline_mode = #tpu.pipeline_mode<synchronous>, transform_indices = @transform_4, window_bounds = array<i64: 16, 1>}, {transform_indices = @transform_5, window_bounds = array<i64: 1, 16, 128>}]} {
    %c0 = arith.constant 0 : index
    %c0_0 = arith.constant 0 : index
    %c0_1 = arith.constant 0 : index
    %0 = vector.load %arg1[%c0, %c0_0, %c0_1] : memref<1x16x128xf32, #tpu.memory_space<vmem>>, vector<1x16x128xf32>
    %1 = vector.shape_cast %0 : vector<1x16x128xf32> to vector<16x128xf32>
    %cst = arith.constant 0.000000e+00 : f32
    %2 = vector.broadcast %cst : f32 to vector<48x4xf32>
    %c0_2 = arith.constant 0 : index
    %c0_3 = arith.constant 0 : index
    %3 = vector.load %arg7[%c0_2, %c0_3] : memref<48x128xf32, #tpu.memory_space<vmem>>, vector<48x4xf32>
    tpu.vector_store %arg7[%c0_2, %c0_3], %2 {strides = array<i32>} : memref<48x128xf32, #tpu.memory_space<vmem>>, vector<48x4xf32>,
    %c0_4 = arith.constant 0 : index
    %c0_5 = arith.constant 0 : index
    %c0_6 = arith.constant 0 : index
    %4 = vector.load %arg1[%c0_4, %c0_5, %c0_6] : memref<1x16x128xf32, #tpu.memory_space<vmem>>, vector<1x16x124xf32>
    %5 = vector.shape_cast %4 : vector<1x16x124xf32> to vector<16x124xf32>
    %c0_7 = arith.constant 0 : index
    %c4 = arith.constant 4 : index
    %6 = vector.load %arg7[%c0_7, %c4] : memref<48x128xf32, #tpu.memory_space<vmem>>, vector<16x124xf32>
    tpu.vector_store %arg7[%c0_7, %c4], %5 {strides = array<i32>} : memref<48x128xf32, #tpu.memory_space<vmem>>, vector<16x124xf32>,
    %c0_8 = arith.constant 0 : index
    %c0_9 = arith.constant 0 : index
    %c0_10 = arith.constant 0 : index
    %7 = vector.load %arg1[%c0_8, %c0_9, %c0_10] : memref<1x16x128xf32, #tpu.memory_space<vmem>>, vector<1x16x126xf32>
    %8 = vector.shape_cast %7 : vector<1x16x126xf32> to vector<16x126xf32>
    %c16 = arith.constant 16 : index
    %c2 = arith.constant 2 : index
    %9 = vector.load %arg7[%c16, %c2] : memref<48x128xf32, #tpu.memory_space<vmem>>, vector<16x126xf32>
    tpu.vector_store %arg7[%c16, %c2], %8 {strides = array<i32>} : memref<48x128xf32, #tpu.memory_space<vmem>>, vector<16x126xf32>,
    %c32 = arith.constant 32 : index
    %c0_11 = arith.constant 0 : index
    %10 = vector.load %arg7[%c32, %c0_11] : memref<48x128xf32, #tpu.memory_space<vmem>>, vector<16x128xf32>
    tpu.vector_store %arg7[%c32, %c0_11], %1 {strides = array<i32>} : memref<48x128xf32, #tpu.memory_space<vmem>>, vector<16x128xf32>,
    %c0_12 = arith.constant 0 : index
    %c0_13 = arith.constant 0 : index
    %11 = vector.load %arg2[%c0_12, %c0_13] : memref<16x48xf32, #tpu.memory_space<vmem>>, vector<16x48xf32>
    %c0_14 = arith.constant 0 : index
    %c0_15 = arith.constant 0 : index
    %12 = vector.load %arg7[%c0_14, %c0_15] : memref<48x128xf32, #tpu.memory_space<vmem>>, vector<48x128xf32>
    %cst_16 = arith.constant dense<0.000000e+00> : vector<16x128xf32>
    %13 = tpu.matmul %11, %12, %cst_16 {dimension_numbers = #tpu.dot_dimension_numbers<[1], [0], [0], [1], [0, 0, 1, 1], [], []>} : vector<16x48xf32>, vector<48x128xf32>, vector<16x128xf32> -> vector<16x128xf32>
    %c0_17 = arith.constant 0 : index
    %c0_18 = arith.constant 0 : index
    %14 = vector.load %arg3[%c0_17, %c0_18] : memref<16x1xf32, #tpu.memory_space<vmem>>, vector<16x1xf32>
    %15 = vector.broadcast %14 : vector<16x1xf32> to vector<16x128xf32>
    %16 = arith.addf %13, %15 : vector<16x128xf32>
    %cst_19 = arith.constant 0.000000e+00 : f32
    %17 = vector.broadcast %cst_19 : f32 to vector<16x128xf32>
    %18 = arith.maximumf %16, %17 : vector<16x128xf32>
    %cst_20 = arith.constant 0.000000e+00 : f32
    %19 = vector.broadcast %cst_20 : f32 to vector<48x4xf32>
    %c0_21 = arith.constant 0 : index
    %c0_22 = arith.constant 0 : index
    %20 = vector.load %arg8[%c0_21, %c0_22] : memref<48x128xf32, #tpu.memory_space<vmem>>, vector<48x4xf32>
    tpu.vector_store %arg8[%c0_21, %c0_22], %19 {strides = array<i32>} : memref<48x128xf32, #tpu.memory_space<vmem>>, vector<48x4xf32>,
    %c32_23 = arith.constant 32 : index
    %c0_24 = arith.constant 0 : index
    %21 = vector.load %arg8[%c32_23, %c0_24] : memref<48x128xf32, #tpu.memory_space<vmem>>, vector<16x128xf32>
    tpu.vector_store %arg8[%c32_23, %c0_24], %18 {strides = array<i32>} : memref<48x128xf32, #tpu.memory_space<vmem>>, vector<16x128xf32>,
    %c32_25 = arith.constant 32 : index
    %c0_26 = arith.constant 0 : index
    %22 = vector.load %arg8[%c32_25, %c0_26] : memref<48x128xf32, #tpu.memory_space<vmem>>, vector<16x124xf32>
    %c0_27 = arith.constant 0 : index
    %c4_28 = arith.constant 4 : index
    %23 = vector.load %arg8[%c0_27, %c4_28] : memref<48x128xf32, #tpu.memory_space<vmem>>, vector<16x124xf32>
    tpu.vector_store %arg8[%c0_27, %c4_28], %22 {strides = array<i32>} : memref<48x128xf32, #tpu.memory_space<vmem>>, vector<16x124xf32>,
    %c32_29 = arith.constant 32 : index
    %c0_30 = arith.constant 0 : index
    %24 = vector.load %arg8[%c32_29, %c0_30] : memref<48x128xf32, #tpu.memory_space<vmem>>, vector<16x126xf32>
    %c16_31 = arith.constant 16 : index
    %c2_32 = arith.constant 2 : index
    %25 = vector.load %arg8[%c16_31, %c2_32] : memref<48x128xf32, #tpu.memory_space<vmem>>, vector<16x126xf32>
    tpu.vector_store %arg8[%c16_31, %c2_32], %24 {strides = array<i32>} : memref<48x128xf32, #tpu.memory_space<vmem>>, vector<16x126xf32>,
    %c0_33 = arith.constant 0 : index
    %c0_34 = arith.constant 0 : index
    %26 = vector.load %arg4[%c0_33, %c0_34] : memref<16x48xf32, #tpu.memory_space<vmem>>, vector<16x48xf32>
    %c0_35 = arith.constant 0 : index
    %c0_36 = arith.constant 0 : index
    %27 = vector.load %arg8[%c0_35, %c0_36] : memref<48x128xf32, #tpu.memory_space<vmem>>, vector<48x128xf32>
    %cst_37 = arith.constant dense<0.000000e+00> : vector<16x128xf32>
    %28 = tpu.matmul %26, %27, %cst_37 {dimension_numbers = #tpu.dot_dimension_numbers<[1], [0], [0], [1], [0, 0, 1, 1], [], []>} : vector<16x48xf32>, vector<48x128xf32>, vector<16x128xf32> -> vector<16x128xf32>
    %c0_38 = arith.constant 0 : index
    %c0_39 = arith.constant 0 : index
    %29 = vector.load %arg5[%c0_38, %c0_39] : memref<16x1xf32, #tpu.memory_space<vmem>>, vector<16x1xf32>
    %30 = vector.broadcast %29 : vector<16x1xf32> to vector<16x128xf32>
    %31 = arith.addf %28, %30 : vector<16x128xf32>
    %cst_40 = arith.constant 0.000000e+00 : f32
    %32 = vector.broadcast %cst_40 : f32 to vector<16x128xf32>
    %33 = arith.maximumf %31, %32 : vector<16x128xf32>
    %34 = arith.addf %33, %1 : vector<16x128xf32>
    %cst_41 = arith.constant 0.000000e+00 : f32
    %35 = vector.broadcast %cst_41 : f32 to vector<16x128xf32>
    %36 = arith.maximumf %34, %35 : vector<16x128xf32>
    %c0_42 = arith.constant 0 : index
    %c0_43 = arith.constant 0 : index
    %c0_44 = arith.constant 0 : index
    %37 = vector.load %arg6[%c0_42, %c0_43, %c0_44] : memref<1x16x128xf32, #tpu.memory_space<vmem>>, vector<1x16x128xf32>
    %38 = vector.shape_cast %37 : vector<1x16x128xf32> to vector<16x128xf32>
    %39 = vector.shape_cast %36 : vector<16x128xf32> to vector<1x16x128xf32>
    tpu.vector_store %arg6[%c0_42, %c0_43, %c0_44], %39 {strides = array<i32>} : memref<1x16x128xf32, #tpu.memory_space<vmem>>, vector<1x16x128xf32>,
    return
  }
  func.func @transform_0(%arg0: i32) -> (i32, i32, i32) {
    %c0_i32 = arith.constant 0 : i32
    %c0_i32_0 = arith.constant 0 : i32
    %c0_i32_1 = arith.constant 0 : i32
    return %arg0, %c0_i32, %c0_i32_0 : i32, i32, i32
  }
  func.func @transform_1(%arg0: i32) -> (i32, i32) {
    %c0_i32 = arith.constant 0 : i32
    %c0_i32_0 = arith.constant 0 : i32
    %c0_i32_1 = arith.constant 0 : i32
    return %c0_i32, %c0_i32_0 : i32, i32
  }
  func.func @transform_2(%arg0: i32) -> (i32, i32) {
    %c0_i32 = arith.constant 0 : i32
    %c0_i32_0 = arith.constant 0 : i32
    %c0_i32_1 = arith.constant 0 : i32
    return %c0_i32, %c0_i32_0 : i32, i32
  }
  func.func @transform_3(%arg0: i32) -> (i32, i32) {
    %c0_i32 = arith.constant 0 : i32
    %c0_i32_0 = arith.constant 0 : i32
    %c0_i32_1 = arith.constant 0 : i32
    return %c0_i32, %c0_i32_0 : i32, i32
  }
  func.func @transform_4(%arg0: i32) -> (i32, i32) {
    %c0_i32 = arith.constant 0 : i32
    %c0_i32_0 = arith.constant 0 : i32
    %c0_i32_1 = arith.constant 0 : i32
    return %c0_i32, %c0_i32_0 : i32, i32
  }
  func.func @transform_5(%arg0: i32) -> (i32, i32, i32) {
    %c0_i32 = arith.constant 0 : i32
    %c0_i32_0 = arith.constant 0 : i32
    %c0_i32_1 = arith.constant 0 : i32
    return %arg0, %c0_i32, %c0_i32_0 : i32, i32, i32
  }
}

</mosaic_0001>

<llo_original>
// kernel: tpu_custom_call.1
$region0: #{tpu_custom_call.1}
  #allocation0 [shape = 'u32[]', space=smem, size = 0x4, offset = 0x4, fixed_abs, tag = 'smem constant byte address 0x4 - core index']
  #allocation1 [shape = 'u32[144,128]{1,0:T(1,128)}', space=vmem, size = 0x12000, scoped, tag = 'internal scratch']
  #allocation2 [shape = 'f32[48,128]{1,0:T(8,128)}', space=vmem, size = 0x6000, scoped, tag = 'scratch operand']
  #allocation3 [shape = 'f32[48,128]{1,0:T(8,128)}', space=vmem, size = 0x6000, scoped, tag = 'scratch operand']
  %s0 = inlined_call_operand.vmem [shape: f32[2,16,128], index: 0, kind: input, shape index: {}]
  %s1 = inlined_call_operand.hbm [shape: f32[16,48], index: 1, kind: input, shape index: {}]
  %s2 = inlined_call_operand.vmem [shape: f32[16,1], index: 2, kind: input, shape index: {}]
  %s3 = inlined_call_operand.hbm [shape: f32[16,48], index: 3, kind: input, shape index: {}]
  %s4 = inlined_call_operand.vmem [shape: f32[16,1], index: 4, kind: input, shape index: {}]
  %s5 = inlined_call_operand.hbm [shape: f32[2,16,128], index: 5, kind: output, shape index: {}]
  %s6 = sld [smem:[#allocation0]]
  $region61: #{tpu_custom_call.1} parent=0
    _
  %s8 = ssub.s32 1, %s6
  %s9 = scalar_select 0, %s8, %s6
  $region1: #{tpu_custom_call.1} parent=0
    #allocation4 [shape = 'u8[8192]{0}', space=vmem, size = 0x2000, scoped, tag = 'input window, operand 1, single buffered']
    #allocation5 [shape = 's32[2]{0}', space=sflag, size = 0x8, scoped, tag = 'scoped memory for tpu_custom_call.1']
    #allocation6 [shape = 's32[2]{0}', space=sflag, size = 0x8, scoped, tag = 'scoped memory for tpu_custom_call.1']
    #allocation7 [shape = 'u8[8192]{0}', space=vmem, size = 0x2000, scoped, tag = 'input window, operand 3, single buffered']
    #allocation8 [shape = 's32[1]{0}', space=sflag, size = 0x4, scoped, tag = 'scoped memory for tpu_custom_call.1']
    #allocation9 [shape = 'u8[16384]{0}', space=vmem, size = 0x4000, scoped, tag = 'output window, operand 0']
    %10 = vsyncpa [#allocation5], 0
    %11 = vsyncpa [#allocation8], 0
    %12 = vsyncpa [#allocation6], 0
    %s13 = scalar_lea.sflag [#allocation6], 1
    %14 = vsyncpa %s13, 0
    loop: start=0, step=1, limit=4
    $region2: #{tpu_custom_call.1} parent=1 // loop_pre_header
      _
    $region3: #{tpu_custom_call.1} parent=1 // loop_header
      %s16 = sphi 0, %s20
      %p17 = scmp.ge.s32.totalorder %s16, 4
      %s26 = sphi 0, %s28
      %s29 = sphi 0, %s26
      %s30 = sphi 0, %s29
      %s46 = sphi 0, %s30
      %s50 = sphi 0, %s50
      %s52 = sphi 0, %s50
      %s53 = sphi 0, %s52
      %s67 = sphi 0, %s53
      %s71 = sphi 0, %s71
      %s73 = sphi 0, %s71
      %s74 = sphi 0, %s73
      %s88 = sphi 0, %s74
      %s92 = sphi 0, %s92
      %s94 = sphi 0, %s92
      %s95 = sphi 0, %s94
      %s109 = sphi 0, %s95
      %s113 = sphi 0, %s113
      %s115 = sphi 0, %s113
      %s116 = sphi 0, %s115
      %s130 = sphi 0, %s116
      %s136 = sphi 0, %s138
      %s139 = sphi 0, %s136
      %s140 = sphi 0, %s139
      %s156 = sphi 0, %s140
    $region4: #{tpu_custom_call.1} parent=1 // loop_header_branch
      %19 = sbr.rel (%p17) target = $region8
    $region5: #{tpu_custom_call.1} parent=1 // loop_body
      %s21 = ssub.s32 %s16, 1
      %s22 = ssub.s32 %s16, 2
      %s23 = sadd.s32 %s16, 1
      %s24 = ssub.s32 %s16, %s23
      %p25 = scmp.eq.s32.totalorder %s24, 0
      %s27 = sadd.s32 %s26, 1
      %s28 = scalar_select %p25, %s26, %s27
      %p31 = pneg %p25
      %p32 = scmp.eq.s32.totalorder %s16, 1
      %p33 = por %p31, %p32
      %p34 = scmp.ne.s32.totalorder %s26, %s29
      %p35 = scmp.eq.s32.totalorder %s16, 0
      %p36 = por %p34, %p35
      %p37 = scmp.ne.s32.totalorder %s26, %s29
      %p38 = scmp.eq.s32.totalorder %s21, 1
      %p39 = por %p37, %p38
      %p40 = scmp.ne.s32.totalorder %s29, %s30
      %p41 = scmp.eq.s32.totalorder %s21, 0
      %p42 = por %p40, %p41
      %p43 = scmp.ne.s32.totalorder %s29, %s30
      %p44 = scmp.eq.s32.totalorder %s22, 1
      %p45 = por %p43, %p44
      %p47 = scmp.ne.s32.totalorder %s30, %s46
      %p48 = scmp.eq.s32.totalorder %s22, 0
      %p49 = por %p47, %p48
      %s51 = sadd.s32 %s50, 1
      %p54 = scmp.eq.s32.totalorder %s16, 1
      %p55 = scmp.ne.s32.totalorder %s50, %s52
      %p56 = scmp.eq.s32.totalorder %s16, 0
      %p57 = por %p55, %p56
      %p58 = scmp.ne.s32.totalorder %s50, %s52
      %p59 = scmp.eq.s32.totalorder %s21, 1
      %p60 = por %p58, %p59
      %p61 = scmp.ne.s32.totalorder %s52, %s53
      %p62 = scmp.eq.s32.totalorder %s21, 0
      %p63 = por %p61, %p62
      %p64 = scmp.ne.s32.totalorder %s52, %s53
      %p65 = scmp.eq.s32.totalorder %s22, 1
      %p66 = por %p64, %p65
      %p68 = scmp.ne.s32.totalorder %s53, %s67
      %p69 = scmp.eq.s32.totalorder %s22, 0
      %p70 = por %p68, %p69
      %s72 = sadd.s32 %s71, 1
      %p75 = scmp.eq.s32.totalorder %s16, 1
      %p76 = scmp.ne.s32.totalorder %s71, %s73
      %p77 = scmp.eq.s32.totalorder %s16, 0
      %p78 = por %p76, %p77
      %p79 = scmp.ne.s32.totalorder %s71, %s73
      %p80 = scmp.eq.s32.totalorder %s21, 1
      %p81 = por %p79, %p80
      %p82 = scmp.ne.s32.totalorder %s73, %s74
      %p83 = scmp.eq.s32.totalorder %s21, 0
      %p84 = por %p82, %p83
      %p85 = scmp.ne.s32.totalorder %s73, %s74
      %p86 = scmp.eq.s32.totalorder %s22, 1
      %p87 = por %p85, %p86
      %p89 = scmp.ne.s32.totalorder %s74, %s88
      %p90 = scmp.eq.s32.totalorder %s22, 0
      %p91 = por %p89, %p90
      %s93 = sadd.s32 %s92, 1
      %p96 = scmp.eq.s32.totalorder %s16, 1
      %p97 = scmp.ne.s32.totalorder %s92, %s94
      %p98 = scmp.eq.s32.totalorder %s16, 0
      %p99 = por %p97, %p98
      %p100 = scmp.ne.s32.totalorder %s92, %s94
      %p101 = scmp.eq.s32.totalorder %s21, 1
      %p102 = por %p100, %p101
      %p103 = scmp.ne.s32.totalorder %s94, %s95
      %p104 = scmp.eq.s32.totalorder %s21, 0
      %p105 = por %p103, %p104
      %p106 = scmp.ne.s32.totalorder %s94, %s95
      %p107 = scmp.eq.s32.totalorder %s22, 1
      %p108 = por %p106, %p107
      %p110 = scmp.ne.s32.totalorder %s95, %s109
      %p111 = scmp.eq.s32.totalorder %s22, 0
      %p112 = por %p110, %p111
      %s114 = sadd.s32 %s113, 1
      %p117 = scmp.eq.s32.totalorder %s16, 1
      %p118 = scmp.ne.s32.totalorder %s113, %s115
      %p119 = scmp.eq.s32.totalorder %s16, 0
      %p120 = por %p118, %p119
      %p121 = scmp.ne.s32.totalorder %s113, %s115
      %p122 = scmp.eq.s32.totalorder %s21, 1
      %p123 = por %p121, %p122
      %p124 = scmp.ne.s32.totalorder %s115, %s116
      %p125 = scmp.eq.s32.totalorder %s21, 0
      %p126 = por %p124, %p125
      %p127 = scmp.ne.s32.totalorder %s115, %s116
      %p128 = scmp.eq.s32.totalorder %s22, 1
      %p129 = por %p127, %p128
      %p131 = scmp.ne.s32.totalorder %s116, %s130
      %p132 = scmp.eq.s32.totalorder %s22, 0
      %p133 = por %p131, %p132
      %s134 = ssub.s32 %s16, %s23
      %p135 = scmp.eq.s32.totalorder %s134, 0
      %s137 = sadd.s32 %s136, 1
      %s138 = scalar_select %p135, %s136, %s137
      %p141 = pneg %p135
      %p142 = scmp.eq.s32.totalorder %s16, 1
      %p143 = por %p141, %p142
      %p144 = scmp.ne.s32.totalorder %s136, %s139
      %p145 = scmp.eq.s32.totalorder %s16, 0
      %p146 = por %p144, %p145
      %p147 = scmp.ne.s32.totalorder %s136, %s139
      %p148 = scmp.eq.s32.totalorder %s21, 1
      %p149 = por %p147, %p148
      %p150 = scmp.ne.s32.totalorder %s139, %s140
      %p151 = scmp.eq.s32.totalorder %s21, 0
      %p152 = por %p150, %p151
      %p153 = scmp.ne.s32.totalorder %s139, %s140
      %p154 = scmp.eq.s32.totalorder %s22, 1
      %p155 = por %p153, %p154
      %p157 = scmp.ne.s32.totalorder %s140, %s156
      %p158 = scmp.eq.s32.totalorder %s22, 0
      %p159 = por %p157, %p158
      %p160 = scmp.le.s32.totalorder 1, %s16
      %p161 = scmp.lt.s32.totalorder %s16, 3
      %p162 = pnand %p160, %p161
      %p163 = pneg %p162
      // Predicated region
      $region9: #{tpu_custom_call.1} parent=5 // pred_check
        _
      $region10: #{tpu_custom_call.1} parent=5 // pred_check_branch
        %165 = sbr.rel (%p162) target = $region12
      $region11: #{tpu_custom_call.1} parent=5 // pred_region
        %s166 = ssub.s32 %s16, 1
        // Predicated region
        $region13: #{tpu_custom_call.1} parent=11 // pred_check
          %p167 = pneg %p63
        $region14: #{tpu_custom_call.1} parent=11 // pred_check_branch
          %169 = sbr.rel (%p167) target = $region16
        $region15: #{tpu_custom_call.1} parent=11 // pred_region
          %s171 = ssub.s32 256, 256
          %172 = vsyncadd [#allocation5], %s171
          %s173 = sshll.u32 [#allocation4], 4
          %s174 = int_to_ptr.vmem [resolvable:$true] %s173
          %179 = dma.hbm_to_vmem [thread:$0]  %s1, 256, %s174, [#allocation5], 128, 128, 8
        $region16: #{tpu_custom_call.1} parent=11 // pred_fallthru
          _
        // Predicated region
        $region17: #{tpu_custom_call.1} parent=11 // pred_check
          %p180 = pneg %p84
        $region18: #{tpu_custom_call.1} parent=11 // pred_check_branch
          %182 = sbr.rel (%p180) target = $region20
        $region19: #{tpu_custom_call.1} parent=11 // pred_region
          _
        $region20: #{tpu_custom_call.1} parent=11 // pred_fallthru
          _
        // Predicated region
        $region21: #{tpu_custom_call.1} parent=11 // pred_check
          %p183 = pneg %p105
        $region22: #{tpu_custom_call.1} parent=11 // pred_check_branch
          %185 = sbr.rel (%p183) target = $region24
        $region23: #{tpu_custom_call.1} parent=11 // pred_region
          %s187 = ssub.s32 256, 256
          %188 = vsyncadd [#allocation8], %s187
          %s189 = sshll.u32 [#allocation7], 4
          %s190 = int_to_ptr.vmem [resolvable:$true] %s189
          %195 = dma.hbm_to_vmem [thread:$0]  %s3, 256, %s190, [#allocation8], 128, 128, 8
        $region24: #{tpu_custom_call.1} parent=11 // pred_fallthru
          _
        // Predicated region
        $region25: #{tpu_custom_call.1} parent=11 // pred_check
          %p196 = pneg %p126
        $region26: #{tpu_custom_call.1} parent=11 // pred_check_branch
          %198 = sbr.rel (%p196) target = $region28
        $region27: #{tpu_custom_call.1} parent=11 // pred_region
          _
        $region28: #{tpu_custom_call.1} parent=11 // pred_fallthru
          _
      $region12: #{tpu_custom_call.1} parent=5 // pred_fallthru
        _
      %p199 = scmp.lt.s32.totalorder %s16, 2
      // Predicated region
      $region29: #{tpu_custom_call.1} parent=5 // pred_check
        %p200 = pneg %p199
      $region30: #{tpu_custom_call.1} parent=5 // pred_check_branch
        %202 = sbr.rel (%p200) target = $region32
      $region31: #{tpu_custom_call.1} parent=5 // pred_region
        // Predicated region
        $region33: #{tpu_custom_call.1} parent=31 // pred_check
          %p203 = pneg %p36
        $region34: #{tpu_custom_call.1} parent=31 // pred_check_branch
          %205 = sbr.rel (%p203) target = $region36
        $region35: #{tpu_custom_call.1} parent=31 // pred_region
          %p206 = scmp.lt.s32.totalorder %s16, 1
          %s207 = scalar_select %p206, %s16, 1
          %s208 = smul.addr %s207, 2
          %s209 = smul.addr %s208, 8
          %s210 = scalar_lea.vmem %s0, %s209
        $region36: #{tpu_custom_call.1} parent=31 // pred_fallthru
          _
      $region32: #{tpu_custom_call.1} parent=5 // pred_fallthru
        _
      %p211 = scmp.le.s32.totalorder 1, %s16
      %p212 = scmp.lt.s32.totalorder %s16, 3
      %p213 = pnand %p211, %p212
      %p214 = pneg %p213
      // Predicated region
      $region37: #{tpu_custom_call.1} parent=5 // pred_check
        _
      $region38: #{tpu_custom_call.1} parent=5 // pred_check_branch
        %216 = sbr.rel (%p213) target = $region40
      $region39: #{tpu_custom_call.1} parent=5 // pred_region
        %s217 = ssub.s32 %s16, 1
        // Predicated region
        $region41: #{tpu_custom_call.1} parent=39 // pred_check
          %p218 = pneg %p63
        $region42: #{tpu_custom_call.1} parent=39 // pred_check_branch
          %220 = sbr.rel (%p218) target = $region44
        $region43: #{tpu_custom_call.1} parent=39 // pred_region
          %221 = dma.done [#allocation5], 256
        $region44: #{tpu_custom_call.1} parent=39 // pred_fallthru
          _
        // Predicated region
        $region45: #{tpu_custom_call.1} parent=39 // pred_check
          %p222 = pneg %p105
        $region46: #{tpu_custom_call.1} parent=39 // pred_check_branch
          %224 = sbr.rel (%p222) target = $region48
        $region47: #{tpu_custom_call.1} parent=39 // pred_region
          %225 = dma.done [#allocation8], 256
        $region48: #{tpu_custom_call.1} parent=39 // pred_fallthru
          _
        %p226 = scmp.lt.s32.totalorder %s21, 1
        %s227 = scalar_select %p226, %s21, 1
        %s228 = smul.addr %s227, 2
        %s229 = smul.addr %s228, 8
        %s230 = scalar_lea.vmem %s0, %s229
        %p231 = pneg %p42
        %p232 = pneg %p39
        %p233 = pneg %p63
        %p234 = pneg %p60
        %p235 = pneg %p84
        %p236 = pneg %p81
        %p237 = pneg %p105
        %p238 = pneg %p102
        %p239 = pneg %p126
        %p240 = pneg %p123
        %p241 = pneg %p152
        %p242 = pneg %p149
        %s243 = sand.u32 %s139, 1
        %s244 = scalar_lea.sflag [#allocation6], %s243
        %s245 = sand.u32 %s139, 1
        %s246 = smul.addr %s245, 16
        %s247 = scalar_lea.vmem [#allocation9], %s246
        %p248 = scmp.lt.s32.totalorder %s21, 1
        %s249 = scalar_select %p248, %s21, 1
        %s250 = smul.addr %s249, 2
        %s251 = smul.addr %s250, 8
        %s252 = scalar_lea.vmem %s0, %s251
        %v253 = vld [vmem:[%s252] sm:$0xff]
        %v254 = vld [vmem:[%s252 + $0x8] sm:$0xff]
        %vm255 = vcmask 31744
        %256 = vst.msk [vmem:[#allocation2] sm:$0xff] %vm255, 0.0
        %257 = vst.msk [vmem:[#allocation2 + $0x8] sm:$0xff] %vm255, 0.0
        %258 = vst.msk [vmem:[#allocation2 + $0x10] sm:$0xff] %vm255, 0.0
        %259 = vst.msk [vmem:[#allocation2 + $0x18] sm:$0xff] %vm255, 0.0
        %260 = vst.msk [vmem:[#allocation2 + $0x20] sm:$0xff] %vm255, 0.0
        %261 = vst.msk [vmem:[#allocation2 + $0x28] sm:$0xff] %vm255, 0.0
        %v262 = vld [vmem:[%s252] sm:$0xff]
        %v263 = vld [vmem:[%s252 + $0x8] sm:$0xff]
        %266 = vrot.lane.b32.xlu0 %v262, 4
        %v267 = vpop.permute.xlu0 %266
        %268 = vrot.lane.b32.xlu0 %v263, 4
        %v269 = vpop.permute.xlu0 %268
        %vm272 = vcmask 1047584
        %273 = vst.msk [vmem:[#allocation2] sm:$0xff] %vm272, %v267
        %274 = vst.msk [vmem:[#allocation2 + $0x8] sm:$0xff] %vm272, %v269
        %v275 = vld [vmem:[%s252] sm:$0xff]
        %v276 = vld [vmem:[%s252 + $0x8] sm:$0xff]
        %279 = vrot.lane.b32.xlu0 %v275, 2
        %v280 = vpop.permute.xlu0 %279
        %281 = vrot.lane.b32.xlu0 %v276, 2
        %v282 = vpop.permute.xlu0 %281
        %vm285 = vcmask 1047568
        %286 = vst.msk [vmem:[#allocation2 + $0x10] sm:$0xff] %vm285, %v280
        %287 = vst.msk [vmem:[#allocation2 + $0x18] sm:$0xff] %vm285, %v282
        %288 = vst [vmem:[#allocation2 + $0x20] sm:$0xff] %v253
        %289 = vst [vmem:[#allocation2 + $0x28] sm:$0xff] %v254
        %v290 = vld [vmem:[#allocation4] sm:$0xff]
        %v291 = vld [vmem:[#allocation4 + $0x8] sm:$0xff]
        %v292 = vld [vmem:[#allocation2] sm:$0xff]
        %v293 = vld [vmem:[#allocation2 + $0x8] sm:$0xff]
        %v294 = vld [vmem:[#allocation2 + $0x10] sm:$0xff]
        %v295 = vld [vmem:[#allocation2 + $0x18] sm:$0xff]
        %v296 = vld [vmem:[#allocation2 + $0x20] sm:$0xff]
        %v297 = vld [vmem:[#allocation2 + $0x28] sm:$0xff]
        %v298 = vld [vmem:[%s2] sm:$0xff]
        %v299 = vld [vmem:[%s2 + $0x8] sm:$0xff]
        %301 = vset.pattern.permute.xlu0 0
        %302 = vperm.xlu0 %301, %v298
        %v303 = vpop.permute.xlu0 %302
        %306 = vset.pattern.permute.xlu0 0
        %307 = vperm.xlu0 %306, %v299
        %v308 = vpop.permute.xlu0 %307
        %vm310 = vcmask 392192
        %v312 = vsel %vm310, %v290, 0
        %v315 = vsel %vm310, %v291, 0
        %317 = vmatprep.subr.mxu0 0.0
        %318 = vmatpush1.msra.mxu0 %v292
        %319 = vmatprep.subr.mxu0 0.0
        %320 = vmatpush1.msra.mxu0 %v293
        %321 = vmatprep.subr.mxu0 0.0
        %322 = vmatpush1.msra.mxu0 %v294
        %323 = vmatprep.subr.mxu0 0.0
        %324 = vmatpush1.msra.mxu0 %v295
        %325 = vmatprep.subr.mxu0 0.0
        %326 = vmatpush1.msra.mxu0 %v296
        %327 = vmatprep.subr.mxu0 0.0
        %328 = vmatpush1.msra.mxu0 %v297
        %329 = vmatprep.subr.mxu0 0.0
        %330 = vmatpush1.msra.mxu0 0.0
        %331 = vmatprep.subr.mxu0 0.0
        %332 = vmatpush1.msra.mxu0 0.0
        %333 = vmatprep.subr.mxu0 0.0
        %334 = vmatpush1.msra.mxu0 0.0
        %335 = vmatprep.subr.mxu0 0.0
        %336 = vmatpush1.msra.mxu0 0.0
        %337 = vmatprep.subr.mxu0 0.0
        %338 = vmatpush1.msra.mxu0 0.0
        %339 = vmatprep.subr.mxu0 0.0
        %340 = vmatpush1.msra.mxu0 0.0
        %341 = vmatprep.subr.mxu0 0.0
        %342 = vmatpush1.msra.mxu0 0.0
        %343 = vmatprep.subr.mxu0 0.0
        %344 = vmatpush1.msra.mxu0 0.0
        %345 = vmatprep.subr.mxu0 0.0
        %346 = vmatpush1.msra.mxu0 0.0
        %347 = vmatprep.subr.mxu0 0.0
        %348 = vmatpush1.msra.mxu0 0.0
        %349 = vmatprep.subr.mxu0 0.0
        %350 = vmatpush1.msra.mxu0 0.0
        %351 = vmatprep.subr.mxu0 0.0
        %352 = vmatpush1.msra.mxu0 0.0
        %353 = vmatprep.subr.mxu0 0.0
        %354 = vmatpush1.msra.mxu0 0.0
        %355 = vmatprep.subr.mxu0 0.0
        %356 = vmatpush1.msra.mxu0 0.0
        %357 = vmatprep.subr.mxu0 0.0
        %358 = vmatpush1.msra.mxu0 0.0
        %359 = vmatprep.subr.mxu0 0.0
        %360 = vmatpush1.msra.mxu0 0.0
        %361 = vmatprep.subr.mxu0 0.0
        %362 = vmatpush1.msra.mxu0 0.0
        %363 = vmatprep.subr.mxu0 0.0
        %364 = vmatpush1.msra.mxu0 0.0
        %365 = vmatprep.subr.mxu0 0.0
        %366 = vmatpush1.msra.mxu0 0.0
        %367 = vmatprep.subr.mxu0 0.0
        %368 = vmatpush1.msra.mxu0 0.0
        %369 = vmatprep.subr.mxu0 0.0
        %370 = vmatpush1.msra.mxu0 0.0
        %371 = vmatprep.subr.mxu0 0.0
        %372 = vmatpush1.msra.mxu0 0.0
        %373 = vmatprep.subr.mxu0 0.0
        %374 = vmatpush1.msra.mxu0 0.0
        %375 = vmatprep.subr.mxu0 0.0
        %376 = vmatpush1.msra.mxu0 0.0
        %377 = vmatprep.subr.mxu0 0.0
        %378 = vmatpush1.msra.mxu0 0.0
        %379 = vmatprep.subr.mxu0 0.0
        %380 = vmatpush1.msra.mxu0 0.0
        %381 = vmatprep.mubr.f32.mxu0 0.0
        %382 = vmatmul.mubr.f32.gmra.mrb[0].mxu0 %v312
        %v383 = vpop.f32.mrb[0].mxu0
        %v384 = vadd.f32 %v303, %v383
        %v385 = vpop.f32.mrb[0].mxu0
        %386 = vmatprep.mubr.f32.mxu0 0.0
        %387 = vmatmul.mubr.f32.gmra.mrb[0].mxu0 %v315
        %v388 = vpop.f32.mrb[0].mxu0
        %v389 = vadd.f32 %v308, %v388
        %v390 = vpop.f32.mrb[0].mxu0
        %391 = vdwg.mxu0
        %v392 = vmax.f32 %v384, 0.0
        %v393 = vmax.f32 %v389, 0.0
        %394 = vst.msk [vmem:[#allocation3] sm:$0xff] %vm255, 0.0
        %395 = vst.msk [vmem:[#allocation3 + $0x8] sm:$0xff] %vm255, 0.0
        %396 = vst.msk [vmem:[#allocation3 + $0x10] sm:$0xff] %vm255, 0.0
        %397 = vst.msk [vmem:[#allocation3 + $0x18] sm:$0xff] %vm255, 0.0
        %398 = vst.msk [vmem:[#allocation3 + $0x20] sm:$0xff] %vm255, 0.0
        %399 = vst.msk [vmem:[#allocation3 + $0x28] sm:$0xff] %vm255, 0.0
        %400 = vst [vmem:[#allocation3 + $0x20] sm:$0xff] %v392
        %401 = vst [vmem:[#allocation3 + $0x28] sm:$0xff] %v393
        %v402 = vld [vmem:[#allocation3 + $0x20] sm:$0xff]
        %v403 = vld [vmem:[#allocation3 + $0x28] sm:$0xff]
        %406 = vrot.lane.b32.xlu0 %v402, 4
        %v407 = vpop.permute.xlu0 %406
        %408 = vrot.lane.b32.xlu0 %v403, 4
        %v409 = vpop.permute.xlu0 %408
        %412 = vst.msk [vmem:[#allocation3] sm:$0xff] %vm272, %v407
        %413 = vst.msk [vmem:[#allocation3 + $0x8] sm:$0xff] %vm272, %v409
        %v414 = vld [vmem:[#allocation3 + $0x20] sm:$0xff]
        %v415 = vld [vmem:[#allocation3 + $0x28] sm:$0xff]
        %418 = vrot.lane.b32.xlu0 %v414, 2
        %v419 = vpop.permute.xlu0 %418
        %420 = vrot.lane.b32.xlu0 %v415, 2
        %v421 = vpop.permute.xlu0 %420
        %424 = vst.msk [vmem:[#allocation3 + $0x10] sm:$0xff] %vm285, %v419
        %425 = vst.msk [vmem:[#allocation3 + $0x18] sm:$0xff] %vm285, %v421
        %v426 = vld [vmem:[#allocation7] sm:$0xff]
        %v427 = vld [vmem:[#allocation7 + $0x8] sm:$0xff]
        %v428 = vld [vmem:[#allocation3] sm:$0xff]
        %v429 = vld [vmem:[#allocation3 + $0x8] sm:$0xff]
        %v430 = vld [vmem:[#allocation3 + $0x10] sm:$0xff]
        %v431 = vld [vmem:[#allocation3 + $0x18] sm:$0xff]
        %v432 = vld [vmem:[#allocation3 + $0x20] sm:$0xff]
        %v433 = vld [vmem:[#allocation3 + $0x28] sm:$0xff]
        %v434 = vld [vmem:[%s4] sm:$0xff]
        %v435 = vld [vmem:[%s4 + $0x8] sm:$0xff]
        %437 = vset.pattern.permute.xlu0 0
        %438 = vperm.xlu0 %437, %v434
        %v439 = vpop.permute.xlu0 %438
        %442 = vset.pattern.permute.xlu0 0
        %443 = vperm.xlu0 %442, %v435
        %v444 = vpop.permute.xlu0 %443
        %v447 = vsel %vm310, %v426, 0
        %v450 = vsel %vm310, %v427, 0
        %452 = vmatprep.subr.mxu0 0.0
        %453 = vmatpush1.msra.mxu0 %v428
        %454 = vmatprep.subr.mxu0 0.0
        %455 = vmatpush1.msra.mxu0 %v429
        %456 = vmatprep.subr.mxu0 0.0
        %457 = vmatpush1.msra.mxu0 %v430
        %458 = vmatprep.subr.mxu0 0.0
        %459 = vmatpush1.msra.mxu0 %v431
        %460 = vmatprep.subr.mxu0 0.0
        %461 = vmatpush1.msra.mxu0 %v432
        %462 = vmatprep.subr.mxu0 0.0
        %463 = vmatpush1.msra.mxu0 %v433
        %464 = vmatprep.subr.mxu0 0.0
        %465 = vmatpush1.msra.mxu0 0.0
        %466 = vmatprep.subr.mxu0 0.0
        %467 = vmatpush1.msra.mxu0 0.0
        %468 = vmatprep.subr.mxu0 0.0
        %469 = vmatpush1.msra.mxu0 0.0
        %470 = vmatprep.subr.mxu0 0.0
        %471 = vmatpush1.msra.mxu0 0.0
        %472 = vmatprep.subr.mxu0 0.0
        %473 = vmatpush1.msra.mxu0 0.0
        %474 = vmatprep.subr.mxu0 0.0
        %475 = vmatpush1.msra.mxu0 0.0
        %476 = vmatprep.subr.mxu0 0.0
        %477 = vmatpush1.msra.mxu0 0.0
        %478 = vmatprep.subr.mxu0 0.0
        %479 = vmatpush1.msra.mxu0 0.0
        %480 = vmatprep.subr.mxu0 0.0
        %481 = vmatpush1.msra.mxu0 0.0
        %482 = vmatprep.subr.mxu0 0.0
        %483 = vmatpush1.msra.mxu0 0.0
        %484 = vmatprep.subr.mxu0 0.0
        %485 = vmatpush1.msra.mxu0 0.0
        %486 = vmatprep.subr.mxu0 0.0
        %487 = vmatpush1.msra.mxu0 0.0
        %488 = vmatprep.subr.mxu0 0.0
        %489 = vmatpush1.msra.mxu0 0.0
        %490 = vmatprep.subr.mxu0 0.0
        %491 = vmatpush1.msra.mxu0 0.0
        %492 = vmatprep.subr.mxu0 0.0
        %493 = vmatpush1.msra.mxu0 0.0
        %494 = vmatprep.subr.mxu0 0.0
        %495 = vmatpush1.msra.mxu0 0.0
        %496 = vmatprep.subr.mxu0 0.0
        %497 = vmatpush1.msra.mxu0 0.0
        %498 = vmatprep.subr.mxu0 0.0
        %499 = vmatpush1.msra.mxu0 0.0
        %500 = vmatprep.subr.mxu0 0.0
        %501 = vmatpush1.msra.mxu0 0.0
        %502 = vmatprep.subr.mxu0 0.0
        %503 = vmatpush1.msra.mxu0 0.0
        %504 = vmatprep.subr.mxu0 0.0
        %505 = vmatpush1.msra.mxu0 0.0
        %506 = vmatprep.subr.mxu0 0.0
        %507 = vmatpush1.msra.mxu0 0.0
        %508 = vmatprep.subr.mxu0 0.0
        %509 = vmatpush1.msra.mxu0 0.0
        %510 = vmatprep.subr.mxu0 0.0
        %511 = vmatpush1.msra.mxu0 0.0
        %512 = vmatprep.subr.mxu0 0.0
        %513 = vmatpush1.msra.mxu0 0.0
        %514 = vmatprep.subr.mxu0 0.0
        %515 = vmatpush1.msra.mxu0 0.0
        %516 = vmatprep.mubr.f32.mxu0 0.0
        %517 = vmatmul.mubr.f32.gmra.mrb[0].mxu0 %v447
        %v518 = vpop.f32.mrb[0].mxu0
        %v519 = vadd.f32 %v439, %v518
        %v520 = vpop.f32.mrb[0].mxu0
        %521 = vmatprep.mubr.f32.mxu0 0.0
        %522 = vmatmul.mubr.f32.gmra.mrb[0].mxu0 %v450
        %v523 = vpop.f32.mrb[0].mxu0
        %v524 = vadd.f32 %v444, %v523
        %v525 = vpop.f32.mrb[0].mxu0
        %526 = vdwg.mxu0
        %v527 = vmax.f32 %v519, 0.0
        %v528 = vmax.f32 %v524, 0.0
        %v529 = vadd.f32 %v527, %v253
        %v530 = vadd.f32 %v528, %v254
        %v531 = vmax.f32 %v529, 0.0
        %v532 = vmax.f32 %v530, 0.0
        %533 = vst [vmem:[%s247] sm:$0xff] %v531
        %534 = vst [vmem:[%s247 + $0x8] sm:$0xff] %v532
        %s535 = sand.u32 %s139, 1
        %s536 = scalar_lea.sflag [#allocation6], %s535
        %s537 = sand.u32 %s139, 1
        %s538 = smul.addr %s537, 16
        %s539 = scalar_lea.vmem [#allocation9], %s538
        // Predicated region
        $region49: #{tpu_custom_call.1} parent=39 // pred_check
          %p540 = pneg %p149
        $region50: #{tpu_custom_call.1} parent=39 // pred_check_branch
          %542 = sbr.rel (%p540) target = $region52
        $region51: #{tpu_custom_call.1} parent=39 // pred_region
          %s544 = ssub.s32 256, 256
          %545 = vsyncadd %s536, %s544
          %s546 = smul.addr %s21, 2
          %s547 = smul.addr %s546, 128
          %s548 = scalar_lea.hbm %s5, %s547
          %s549 = sshll.u32 %s539, 4
          %s550 = int_to_ptr.vmem [resolvable:$true] %s549
          %555 = dma.vmem_to_hbm [thread:$0]  %s550, 256, %s548, %s536, 128, 128, 8
        $region52: #{tpu_custom_call.1} parent=39 // pred_fallthru
          _
      $region40: #{tpu_custom_call.1} parent=5 // pred_fallthru
        _
      %p556 = scmp.le.s32.totalorder 2, %s16
      // Predicated region
      $region53: #{tpu_custom_call.1} parent=5 // pred_check
        %p557 = pneg %p556
      $region54: #{tpu_custom_call.1} parent=5 // pred_check_branch
        %559 = sbr.rel (%p557) target = $region56
      $region55: #{tpu_custom_call.1} parent=5 // pred_region
        %s560 = ssub.s32 %s16, 2
        // Predicated region
        $region57: #{tpu_custom_call.1} parent=55 // pred_check
          %p561 = pneg %p155
        $region58: #{tpu_custom_call.1} parent=55 // pred_check_branch
          %563 = sbr.rel (%p561) target = $region60
        $region59: #{tpu_custom_call.1} parent=55 // pred_region
          %s564 = sand.u32 %s140, 1
          %s565 = scalar_lea.sflag [#allocation6], %s564
          %s566 = sand.u32 %s140, 1
          %s567 = smul.addr %s566, 16
          %s568 = scalar_lea.vmem [#allocation9], %s567
          %569 = dma.done %s565, 256
        $region60: #{tpu_custom_call.1} parent=55 // pred_fallthru
          _
      $region56: #{tpu_custom_call.1} parent=5 // pred_fallthru
        _
    $region6: #{tpu_custom_call.1} parent=1 // loop_footer
      %s20 = sadd.s32 1, %s16
    $region7: #{tpu_custom_call.1} parent=1 // loop_footer_branch
      %15 = sbr.rel target = $region3
    $region8: #{tpu_custom_call.1} parent=1 // loop_exit
      _
    %570 = vsyncpa [#allocation5], 1
    %s571 = scalar_lea.sflag [#allocation5], 1
    %572 = vsyncpa %s571, 1
    %573 = vsyncpa [#allocation8], 1
    %574 = vsyncpa [#allocation6], 1
    %s575 = scalar_lea.sflag [#allocation6], 1
    %576 = vsyncpa %s575, 1

</llo_original>
